<compile_context>
chip_gen: v6e
topology: v6e:2x2x1
jax: 0.10.0
libtpu: 0.0.40
codegen_flags: <defaults>
</compile_context>

<pallas_src>
import functools

import jax
import jax.numpy as jnp
from jax import lax
from jax.experimental import pallas as pl
from jax.experimental.pallas import tpu as pltpu


_VMEM_LIMIT = 32 * 1024 * 1024   # explicit scoped-VMEM limit (safe on v5e/v6e/v7x)
_BLOCK_M = 1024                  # lane tile for the M = N*Ho*Wo axis
_BN_EPS = 1e-5


def _pick_block_m(m, target=_BLOCK_M):
    """Largest lane tile that evenly divides m (whole-array block if small)."""
    if m <= target:
        return m
    for bm in (target, 512, 256, 128):
        if m % bm == 0:
            return bm
    return m


# --------------------------------------------------------------------------
# Pallas kernels
# --------------------------------------------------------------------------
def _fused_matmul_bn_relu_kernel(w_ref, p_ref, g_ref, b_ref, o_ref, *, eps):
    """Single-block path: whole (Cout, M) layer resident in VMEM."""
    y = jnp.dot(w_ref[...], p_ref[...], preferred_element_type=jnp.float32)
    m = y.shape[1]
    # One-pass sum / sum-of-squares BN statistics (lane-axis reduce).
    s1 = jnp.sum(y, axis=1, keepdims=True)
    s2 = jnp.sum(y * y, axis=1, keepdims=True)
    mean = s1 * (1.0 / m)
    var = jnp.maximum(s2 * (1.0 / m) - mean * mean, 0.0)
    scale = g_ref[...] * lax.rsqrt(var + eps)
    shift = b_ref[...] - mean * scale
    o_ref[...] = jnp.maximum(y * scale + shift, 0.0)


def _matmul_stats_kernel(w_ref, p_ref, y_ref, s1_ref, s2_ref):
    """Tiled path, pass 1: bf16 matmul + per-tile BN partial sums."""
    y = jnp.dot(w_ref[...], p_ref[...], preferred_element_type=jnp.float32)
    y_ref[...] = y
    c = y.shape[0]
    s1 = jnp.sum(y, axis=1, keepdims=True)
    s2 = jnp.sum(y * y, axis=1, keepdims=True)
    # Broadcast over the 128-lane stats block so the store stays (8,128)-tiled.
    s1_ref[...] = pl.broadcast_to(s1, (c, 128))
    s2_ref[...] = pl.broadcast_to(s2, (c, 128))


def _affine_relu_kernel(y_ref, scale_ref, shift_ref, o_ref):
    """Tiled path, pass 2: per-channel affine (folded BN) + ReLU."""
    o_ref[...] = jnp.maximum(y_ref[...] * scale_ref[...] + shift_ref[...], 0.0)


def _matmul_tanh_kernel(w_ref, p_ref, o_ref):
    """Final layer: bf16 matmul + tanh (no BN)."""
    y = jnp.dot(w_ref[...], p_ref[...], preferred_element_type=jnp.float32)
    o_ref[...] = jnp.tanh(y)


# --------------------------------------------------------------------------
# Kernel wrappers
# --------------------------------------------------------------------------
def matmul_bn_relu(w_t, p_t, gamma, beta, *, eps=_BN_EPS):
    """(Cout, K) @ (K, M) -> BatchNorm(batch stats) -> ReLU, output (Cout, M)."""
    c_out, k_dim = w_t.shape
    _, m = p_t.shape
    bm = _pick_block_m(m)
    nt = m // bm
    g = gamma.reshape(c_out, 1).astype(jnp.float32)
    b = beta.reshape(c_out, 1).astype(jnp.float32)

    if nt == 1:
        kernel = functools.partial(_fused_matmul_bn_relu_kernel, eps=eps)
        return pl.pallas_call(
            kernel,
            out_shape=jax.ShapeDtypeStruct((c_out, m), jnp.float32),
            in_specs=[pl.BlockSpec(memory_space=pltpu.MemorySpace.VMEM)] * 4,
            out_specs=pl.BlockSpec(memory_space=pltpu.MemorySpace.VMEM),
            compiler_params=pltpu.CompilerParams(vmem_limit_bytes=_VMEM_LIMIT),
        )(w_t, p_t, g, b)

    # Pass 1: matmul + per-tile partial statistics. M tiles are independent
    # ("parallel" -> megacore); partials are reduced below so BN statistics
    # still cover ALL M rows (PyTorch training semantics).
    y_pre, s1p, s2p = pl.pallas_call(
        _matmul_stats_kernel,
        out_shape=(jax.ShapeDtypeStruct((c_out, m), jnp.float32),
                   jax.ShapeDtypeStruct((c_out, nt * 128), jnp.float32),
                   jax.ShapeDtypeStruct((c_out, nt * 128), jnp.float32)),
        grid=(nt,),
        in_specs=[pl.BlockSpec((c_out, k_dim), lambda i: (0, 0)),
                  pl.BlockSpec((k_dim, bm), lambda i: (0, i))],
        out_specs=(pl.BlockSpec((c_out, bm), lambda i: (0, i)),
                   pl.BlockSpec((c_out, 128), lambda i: (0, i)),
                   pl.BlockSpec((c_out, 128), lambda i: (0, i))),
        compiler_params=pltpu.CompilerParams(
            dimension_semantics=("parallel",),
            vmem_limit_bytes=_VMEM_LIMIT),
    )(w_t, p_t)

    # Tiny per-channel reduction / fold of BN into a single affine (f32).
    s1 = s1p.reshape(c_out, nt, 128)[:, :, 0].sum(axis=1)
    s2 = s2p.reshape(c_out, nt, 128)[:, :, 0].sum(axis=1)
    mean = s1 / m
    var = jnp.maximum(s2 / m - mean * mean, 0.0)
    inv = lax.rsqrt(var + eps)
    scale = (gamma * inv).reshape(c_out, 1).astype(jnp.float32)
    shift = (beta - mean * gamma * inv).reshape(c_out, 1).astype(jnp.float32)

    # Pass 2: fused affine + ReLU over the same lane-dense tiles.
    return pl.pallas_call(
        _affine_relu_kernel,
        out_shape=jax.ShapeDtypeStruct((c_out, m), jnp.float32),
        grid=(nt,),
        in_specs=[pl.BlockSpec((c_out, bm), lambda i: (0, i)),
                  pl.BlockSpec((c_out, 1), lambda i: (0, 0)),
                  pl.BlockSpec((c_out, 1), lambda i: (0, 0))],
        out_specs=pl.BlockSpec((c_out, bm), lambda i: (0, i)),
        compiler_params=pltpu.CompilerParams(
            dimension_semantics=("parallel",),
            vmem_limit_bytes=_VMEM_LIMIT),
    )(y_pre, scale, shift)


def matmul_tanh(w_t, p_t):
    """(Cout, K) @ (K, M) -> tanh, output (Cout, M), tiled over M."""
    c_out, k_dim = w_t.shape
    _, m = p_t.shape
    bm = _pick_block_m(m)
    nt = m // bm
    return pl.pallas_call(
        _matmul_tanh_kernel,
        out_shape=jax.ShapeDtypeStruct((c_out, m), jnp.float32),
        grid=(nt,),
        in_specs=[pl.BlockSpec((c_out, k_dim), lambda i: (0, 0)),
                  pl.BlockSpec((k_dim, bm), lambda i: (0, i))],
        out_specs=pl.BlockSpec((c_out, bm), lambda i: (0, i)),
        compiler_params=pltpu.CompilerParams(
            dimension_semantics=("parallel",),
            vmem_limit_bytes=_VMEM_LIMIT),
    )(w_t, p_t)


# --------------------------------------------------------------------------
# Glue: ConvTranspose2d -> (input-dilate + pad + flip-kernel) im2col, CNHW
# --------------------------------------------------------------------------
def _convT_to_matmul_operands(h_cnhw, w, stride, padding):
    """Lower ConvTranspose2d to  W_t (Cout, K)  and  P_t (K, M = N*Ho*Wo).

    h_cnhw: activations in channels-first (Cin, N, H, W) layout.
    w:      PyTorch ConvTranspose2d weight (Cin, Cout, k, k).
    """
    c_in, n, h, w_sp = h_cnhw.shape
    _, c_out, k, _ = w.shape

    # TODO(synk): stride-2 layers could be decomposed into 4 output phases
    # instead of zero-dilating the input (removes ~4x zero-MXU work / bytes).
    if stride > 1:
        hd, wd = (h - 1) * stride + 1, (w_sp - 1) * stride + 1
        xd = jnp.zeros((c_in, n, hd, wd), h_cnhw.dtype)
        xd = xd.at[:, :, ::stride, ::stride].set(h_cnhw)
    else:
        xd = h_cnhw
    pad = k - 1 - padding
    xp = jnp.pad(xd, ((0, 0), (0, 0), (pad, pad), (pad, pad)))
    xp = xp.astype(jnp.bfloat16)           # bf16 MXU operands (halves HBM bytes)

    h_out = (h - 1) * stride - 2 * padding + k
    w_out = (w_sp - 1) * stride - 2 * padding + k

    # TODO(synk): the k*k tap expansion is still materialized in HBM; folding
    # the taps into a grid axis with shifted-window index_maps inside the
    # kernel would remove this 16x activation blow-up entirely.
    slabs = [xp[:, :, kh:kh + h_out, kw:kw + w_out]
             for kh in range(k) for kw in range(k)]      # each (Cin, N, Ho, Wo)
    p_t = jnp.stack(slabs, axis=0).reshape(k * k * c_in, n * h_out * w_out)

    # Flipped kernel, (Cout, K) with K ordered (kh, kw, Cin) matching p_t rows.
    wf = w[:, :, ::-1, ::-1]                             # (Cin, Cout, k, k)
    w_t = jnp.transpose(wf, (1, 2, 3, 0)).reshape(c_out, k * k * c_in)
    w_t = w_t.astype(jnp.bfloat16)
    return p_t, w_t, (n, h_out, w_out, c_out)


# --------------------------------------------------------------------------
# Generator parameters and forward pass
# --------------------------------------------------------------------------
def init_generator_params(key, latent_size, n_channels, features_g):
    specs = [
        (latent_size,      features_g * 8, 1, 0),
        (features_g * 8,   features_g * 4, 2, 1),
        (features_g * 4,   features_g * 2, 2, 1),
        (features_g * 2,   features_g,     2, 1),
        (features_g,       n_channels,     2, 1),
    ]
    convs, bns = [], []
    for i, (c_in, c_out, s, p) in enumerate(specs):
        key, sub = jax.random.split(key)
        w = 0.02 * jax.random.normal(sub, (c_in, c_out, 4, 4), jnp.float32)
        convs.append((w, s, p))
        if i < len(specs) - 1:
            # nn.BatchNorm2d default affine init: weight=1, bias=0
            bns.append((jnp.ones((c_out,), jnp.float32),
                        jnp.zeros((c_out,), jnp.float32)))
    return {"convs": convs, "bn": bns}


def generator_forward(x, params):
    # NCHW -> channels-first-flat (C, N, H, W); the activation stays in this
    # layout between layers so kernel outputs stay lane-dense (last dim = M).
    h = jnp.transpose(x, (1, 0, 2, 3))
    n_layers = len(params["convs"])
    for i, (w, stride, padding) in enumerate(params["convs"]):
        p_t, w_t, (n, ho, wo, co) = _convT_to_matmul_operands(
            h, w, stride, padding)
        if i == n_layers - 1:
            y = matmul_tanh(w_t, p_t)                    # (Cout, M)
        else:
            gamma, beta = params["bn"][i]
            y = matmul_bn_relu(w_t, p_t, gamma, beta)    # (Cout, M)
        h = y.reshape(co, n, ho, wo)
    return jnp.transpose(h, (1, 0, 2, 3))                # back to NCHW


# --------------------------------------------------------------------------
# Pure-JAX f32 reference (lax.conv with lhs dilation == transposed conv)
# --------------------------------------------------------------------------
def reference_forward(x, params):
    h = x
    n_layers = len(params["convs"])
    for i, (w, stride, padding) in enumerate(params["convs"]):
        k = w.shape[-1]
        wf = jnp.transpose(w[:, :, ::-1, ::-1], (1, 0, 2, 3))   # (Cout, Cin, k, k)
        pad = k - 1 - padding
        h = lax.conv_general_dilated(
            h, wf, window_strides=(1, 1),
            padding=[(pad, pad), (pad, pad)],
            lhs_dilation=(stride, stride),
            dimension_numbers=("NCHW", "OIHW", "NCHW"),
            precision=lax.Precision.HIGHEST)
        if i < n_layers - 1:
            gamma, beta = params["bn"][i]
            mean = jnp.mean(h, axis=(0, 2, 3), keepdims=True)
            var = jnp.mean(jnp.square(h - mean), axis=(0, 2, 3), keepdims=True)
            h = (h - mean) * lax.rsqrt(var + 1e-5)
            h = h * gamma.reshape(1, -1, 1, 1) + beta.reshape(1, -1, 1, 1)
            h = jnp.maximum(h, 0.0)
        else:
            h = jnp.tanh(h)
    return h


if __name__ == "__main__":
    latent_size, n_channels, features_g = 32, 3, 8
    batch = 2

    key = jax.random.PRNGKey(0)
    k_params, k_x = jax.random.split(key)
    params = init_generator_params(k_params, latent_size, n_channels, features_g)
    x = jax.random.normal(k_x, (batch, latent_size, 1, 1), jnp.float32)

    out = jax.block_until_ready(generator_forward(x, params))
    assert out.shape == (batch, n_channels, 64, 64), out.shape

    ref = jax.block_until_ready(reference_forward(x, params))
    max_err = float(jnp.max(jnp.abs(out - ref)))
    # bf16 MXU operands (f32 accumulation) vs an f32-HIGHEST reference across
    # 5 stacked layers -> allow a few percent absolute error on [-1, 1] output.
    assert max_err < 6e-2, f"mismatch vs reference: {max_err}"

    print("KERNEL_OK")
</pallas_src>

<mosaic_0001>
module attributes {stable_mosaic.version = 11 : i64} {
  func.func @_fused_matmul_bn_relu_kernel(%arg0: memref<64x512xbf16, #tpu.memory_space<vmem>>, %arg1: memref<512x32xbf16, #tpu.memory_space<vmem>>, %arg2: memref<64x1xf32, #tpu.memory_space<vmem>>, %arg3: memref<64x1xf32, #tpu.memory_space<vmem>>, %arg4: memref<64x32xf32, #tpu.memory_space<vmem>>) attributes {dimension_semantics = [], scalar_prefetch = 0 : i64, scratch_operands = 0 : i64, tpu.core_type = #tpu.core_type<tc>} {
    %c0 = arith.constant 0 : index
    %c0_0 = arith.constant 0 : index
    %0 = vector.load %arg0[%c0, %c0_0] : memref<64x512xbf16, #tpu.memory_space<vmem>>, vector<64x512xbf16>
    %c0_1 = arith.constant 0 : index
    %c0_2 = arith.constant 0 : index
    %1 = vector.load %arg1[%c0_1, %c0_2] : memref<512x32xbf16, #tpu.memory_space<vmem>>, vector<512x32xbf16>
    %cst = arith.constant dense<0.000000e+00> : vector<64x32xf32>
    %2 = tpu.matmul %0, %1, %cst {dimension_numbers = #tpu.dot_dimension_numbers<[1], [0], [0], [1], [0, 0, 1, 1], [], []>} : vector<64x512xbf16>, vector<512x32xbf16>, vector<64x32xf32> -> vector<64x32xf32>
    %cst_3 = arith.constant dense<0.000000e+00> : vector<64xf32>
    %3 = vector.multi_reduction <add>, %2, %cst_3 [1] : vector<64x32xf32> to vector<64xf32>
    %4 = vector.shape_cast %3 : vector<64xf32> to vector<64x1xf32>
    %5 = arith.mulf %2, %2 : vector<64x32xf32>
    %cst_4 = arith.constant dense<0.000000e+00> : vector<64xf32>
    %6 = vector.multi_reduction <add>, %5, %cst_4 [1] : vector<64x32xf32> to vector<64xf32>
    %7 = vector.shape_cast %6 : vector<64xf32> to vector<64x1xf32>
    %cst_5 = arith.constant 3.125000e-02 : f32
    %8 = vector.broadcast %cst_5 : f32 to vector<64x1xf32>
    %9 = arith.mulf %4, %8 : vector<64x1xf32>
    %cst_6 = arith.constant 3.125000e-02 : f32
    %10 = vector.broadcast %cst_6 : f32 to vector<64x1xf32>
    %11 = arith.mulf %7, %10 : vector<64x1xf32>
    %12 = arith.mulf %9, %9 : vector<64x1xf32>
    %13 = arith.subf %11, %12 : vector<64x1xf32>
    %cst_7 = arith.constant 0.000000e+00 : f32
    %14 = vector.broadcast %cst_7 : f32 to vector<64x1xf32>
    %15 = arith.maximumf %13, %14 : vector<64x1xf32>
    %c0_8 = arith.constant 0 : index
    %c0_9 = arith.constant 0 : index
    %16 = vector.load %arg2[%c0_8, %c0_9] : memref<64x1xf32, #tpu.memory_space<vmem>>, vector<64x1xf32>
    %cst_10 = arith.constant 9.99999974E-6 : f32
    %17 = vector.broadcast %cst_10 : f32 to vector<64x1xf32>
    %18 = arith.addf %15, %17 : vector<64x1xf32>
    %19 = math.rsqrt %18 : vector<64x1xf32>
    %20 = arith.mulf %16, %19 : vector<64x1xf32>
    %c0_11 = arith.constant 0 : index
    %c0_12 = arith.constant 0 : index
    %21 = vector.load %arg3[%c0_11, %c0_12] : memref<64x1xf32, #tpu.memory_space<vmem>>, vector<64x1xf32>
    %22 = arith.mulf %9, %20 : vector<64x1xf32>
    %23 = arith.subf %21, %22 : vector<64x1xf32>
    %24 = vector.broadcast %20 : vector<64x1xf32> to vector<64x32xf32>
    %25 = arith.mulf %2, %24 : vector<64x32xf32>
    %26 = vector.broadcast %23 : vector<64x1xf32> to vector<64x32xf32>
    %27 = arith.addf %25, %26 : vector<64x32xf32>
    %cst_13 = arith.constant 0.000000e+00 : f32
    %28 = vector.broadcast %cst_13 : f32 to vector<64x32xf32>
    %29 = arith.maximumf %27, %28 : vector<64x32xf32>
    %c0_14 = arith.constant 0 : index
    %c0_15 = arith.constant 0 : index
    %30 = vector.load %arg4[%c0_14, %c0_15] : memref<64x32xf32, #tpu.memory_space<vmem>>, vector<64x32xf32>
    tpu.vector_store %arg4[%c0_14, %c0_15], %29 {strides = array<i32>} : memref<64x32xf32, #tpu.memory_space<vmem>>, vector<64x32xf32>,
    return
  }
}

</mosaic_0001>

<llo_original>
// kernel: tpu_custom_call.1
$region0: #{tpu_custom_call.1}
  #allocation0 [shape = 'u32[]', space=smem, size = 0x4, offset = 0x4, fixed_abs, tag = 'smem constant byte address 0x4 - core index']
  #allocation1 [shape = 'u32[144,128]{1,0:T(1,128)}', space=vmem, size = 0x12000, scoped, tag = 'internal scratch']
  %s0 = inlined_call_operand.vmem [shape: bf16[64,512], index: 0, kind: input, shape index: {}]
  %s1 = inlined_call_operand.vmem [shape: bf16[512,32], index: 1, kind: input, shape index: {}]
  %s2 = inlined_call_operand.vmem [shape: f32[64,1], index: 2, kind: input, shape index: {}]
  %s3 = inlined_call_operand.vmem [shape: f32[64,1], index: 3, kind: input, shape index: {}]
  %s4 = inlined_call_operand.vmem [shape: f32[64,32], index: 4, kind: output, shape index: {}]
  %s5 = sld [smem:[#allocation0]]
  $region26: #{tpu_custom_call.1} parent=0
    _
  %s7 = ssub.s32 1, %s5
  %s8 = scalar_select 0, %s7, %s5
  // Predicated region
  $region2: #{tpu_custom_call.1} parent=0 // pred_check
    _
  $region3: #{tpu_custom_call.1} parent=0 // pred_check_branch
    %10 = sbr.rel (0) target = $region5
  $region4: #{tpu_custom_call.1} parent=0 // pred_region
    _
  $region5: #{tpu_custom_call.1} parent=0 // pred_fallthru
    _
  // Predicated region
  $region6: #{tpu_custom_call.1} parent=0 // pred_check
    _
  $region7: #{tpu_custom_call.1} parent=0 // pred_check_branch
    %12 = sbr.rel (0) target = $region9
  $region8: #{tpu_custom_call.1} parent=0 // pred_region
    _
  $region9: #{tpu_custom_call.1} parent=0 // pred_fallthru
    _
  // Predicated region
  $region10: #{tpu_custom_call.1} parent=0 // pred_check
    _
  $region11: #{tpu_custom_call.1} parent=0 // pred_check_branch
    %14 = sbr.rel (0) target = $region13
  $region12: #{tpu_custom_call.1} parent=0 // pred_region
    _
  $region13: #{tpu_custom_call.1} parent=0 // pred_fallthru
    _
  // Predicated region
  $region14: #{tpu_custom_call.1} parent=0 // pred_check
    _
  $region15: #{tpu_custom_call.1} parent=0 // pred_check_branch
    %16 = sbr.rel (0) target = $region17
  $region16: #{tpu_custom_call.1} parent=0 // pred_region
    _
  $region17: #{tpu_custom_call.1} parent=0 // pred_fallthru
    _
  %v18 = vld [vmem:[%s0] sm:$0xff]
  %v19 = vld [vmem:[%s0 + $0x8] sm:$0xff]
  %v20 = vld [vmem:[%s0 + $0x10] sm:$0xff]
  %v21 = vld [vmem:[%s0 + $0x18] sm:$0xff]
  %v22 = vld [vmem:[%s0 + $0x20] sm:$0xff]
  %v23 = vld [vmem:[%s0 + $0x28] sm:$0xff]
  %v24 = vld [vmem:[%s0 + $0x30] sm:$0xff]
  %v25 = vld [vmem:[%s0 + $0x38] sm:$0xff]
  %v26 = vld [vmem:[%s0 + $0x40] sm:$0xff]
  %v27 = vld [vmem:[%s0 + $0x48] sm:$0xff]
  %v28 = vld [vmem:[%s0 + $0x50] sm:$0xff]
  %v29 = vld [vmem:[%s0 + $0x58] sm:$0xff]
  %v30 = vld [vmem:[%s0 + $0x60] sm:$0xff]
  %v31 = vld [vmem:[%s0 + $0x68] sm:$0xff]
  %v32 = vld [vmem:[%s0 + $0x70] sm:$0xff]
  %v33 = vld [vmem:[%s0 + $0x78] sm:$0xff]
  %v34 = vld [vmem:[%s1] sm:$0xf]
  %v35 = vld [vmem:[%s1 + $0x4] sm:$0xf]
  %v36 = vld [vmem:[%s1 + $0x8] sm:$0xf]
  %v37 = vld [vmem:[%s1 + $0xc] sm:$0xf]
  %v38 = vld [vmem:[%s1 + $0x10] sm:$0xf]
  %v39 = vld [vmem:[%s1 + $0x14] sm:$0xf]
  %v40 = vld [vmem:[%s1 + $0x18] sm:$0xf]
  %v41 = vld [vmem:[%s1 + $0x1c] sm:$0xf]
  %v42 = vld [vmem:[%s1 + $0x20] sm:$0xf]
  %v43 = vld [vmem:[%s1 + $0x24] sm:$0xf]
  %v44 = vld [vmem:[%s1 + $0x28] sm:$0xf]
  %v45 = vld [vmem:[%s1 + $0x2c] sm:$0xf]
  %v46 = vld [vmem:[%s1 + $0x30] sm:$0xf]
  %v47 = vld [vmem:[%s1 + $0x34] sm:$0xf]
  %v48 = vld [vmem:[%s1 + $0x38] sm:$0xf]
  %v49 = vld [vmem:[%s1 + $0x3c] sm:$0xf]
  %v50 = vld [vmem:[%s1 + $0x40] sm:$0xf]
  %v51 = vld [vmem:[%s1 + $0x44] sm:$0xf]
  %v52 = vld [vmem:[%s1 + $0x48] sm:$0xf]
  %v53 = vld [vmem:[%s1 + $0x4c] sm:$0xf]
  %v54 = vld [vmem:[%s1 + $0x50] sm:$0xf]
  %v55 = vld [vmem:[%s1 + $0x54] sm:$0xf]
  %v56 = vld [vmem:[%s1 + $0x58] sm:$0xf]
  %v57 = vld [vmem:[%s1 + $0x5c] sm:$0xf]
  %v58 = vld [vmem:[%s1 + $0x60] sm:$0xf]
  %v59 = vld [vmem:[%s1 + $0x64] sm:$0xf]
  %v60 = vld [vmem:[%s1 + $0x68] sm:$0xf]
  %v61 = vld [vmem:[%s1 + $0x6c] sm:$0xf]
  %v62 = vld [vmem:[%s1 + $0x70] sm:$0xf]
  %v63 = vld [vmem:[%s1 + $0x74] sm:$0xf]
  %v64 = vld [vmem:[%s1 + $0x78] sm:$0xf]
  %v65 = vld [vmem:[%s1 + $0x7c] sm:$0xf]
  %v66 = vld [vmem:[%s1 + $0x80] sm:$0xf]
  %v67 = vld [vmem:[%s1 + $0x84] sm:$0xf]
  %v68 = vld [vmem:[%s1 + $0x88] sm:$0xf]
  %v69 = vld [vmem:[%s1 + $0x8c] sm:$0xf]
  %v70 = vld [vmem:[%s1 + $0x90] sm:$0xf]
  %v71 = vld [vmem:[%s1 + $0x94] sm:$0xf]
  %v72 = vld [vmem:[%s1 + $0x98] sm:$0xf]
  %v73 = vld [vmem:[%s1 + $0x9c] sm:$0xf]
  %v74 = vld [vmem:[%s1 + $0xa0] sm:$0xf]
  %v75 = vld [vmem:[%s1 + $0xa4] sm:$0xf]
  %v76 = vld [vmem:[%s1 + $0xa8] sm:$0xf]
  %v77 = vld [vmem:[%s1 + $0xac] sm:$0xf]
  %v78 = vld [vmem:[%s1 + $0xb0] sm:$0xf]
  %v79 = vld [vmem:[%s1 + $0xb4] sm:$0xf]
  %v80 = vld [vmem:[%s1 + $0xb8] sm:$0xf]
  %v81 = vld [vmem:[%s1 + $0xbc] sm:$0xf]
  %v82 = vld [vmem:[%s1 + $0xc0] sm:$0xf]
  %v83 = vld [vmem:[%s1 + $0xc4] sm:$0xf]
  %v84 = vld [vmem:[%s1 + $0xc8] sm:$0xf]
  %v85 = vld [vmem:[%s1 + $0xcc] sm:$0xf]
  %v86 = vld [vmem:[%s1 + $0xd0] sm:$0xf]
  %v87 = vld [vmem:[%s1 + $0xd4] sm:$0xf]
  %v88 = vld [vmem:[%s1 + $0xd8] sm:$0xf]
  %v89 = vld [vmem:[%s1 + $0xdc] sm:$0xf]
  %v90 = vld [vmem:[%s1 + $0xe0] sm:$0xf]
  %v91 = vld [vmem:[%s1 + $0xe4] sm:$0xf]
  %v92 = vld [vmem:[%s1 + $0xe8] sm:$0xf]
  %v93 = vld [vmem:[%s1 + $0xec] sm:$0xf]
  %v94 = vld [vmem:[%s1 + $0xf0] sm:$0xf]
  %v95 = vld [vmem:[%s1 + $0xf4] sm:$0xf]
  %v96 = vld [vmem:[%s1 + $0xf8] sm:$0xf]
  %v97 = vld [vmem:[%s1 + $0xfc] sm:$0xf]
  %v114 = vunpack.c.l.b16 %v18
  %v115 = vunpack.c.h.b16 %v18
  %v116 = vunpack.c.l.b16 %v19
  %v117 = vunpack.c.h.b16 %v19
  %v118 = vunpack.c.l.b16 %v20
  %v119 = vunpack.c.h.b16 %v20
  %v120 = vunpack.c.l.b16 %v21
  %v121 = vunpack.c.h.b16 %v21
  %v122 = vunpack.c.l.b16 %v22
  %v123 = vunpack.c.h.b16 %v22
  %v124 = vunpack.c.l.b16 %v23
  %v125 = vunpack.c.h.b16 %v23
  %v126 = vunpack.c.l.b16 %v24
  %v127 = vunpack.c.h.b16 %v24
  %v128 = vunpack.c.l.b16 %v25
  %v129 = vunpack.c.h.b16 %v25
  %v130 = vunpack.c.l.b16 %v26
  %v131 = vunpack.c.h.b16 %v26
  %v132 = vunpack.c.l.b16 %v27
  %v133 = vunpack.c.h.b16 %v27
  %v134 = vunpack.c.l.b16 %v28
  %v135 = vunpack.c.h.b16 %v28
  %v136 = vunpack.c.l.b16 %v29
  %v137 = vunpack.c.h.b16 %v29
  %v138 = vunpack.c.l.b16 %v30
  %v139 = vunpack.c.h.b16 %v30
  %v140 = vunpack.c.l.b16 %v31
  %v141 = vunpack.c.h.b16 %v31
  %v142 = vunpack.c.l.b16 %v32
  %v143 = vunpack.c.h.b16 %v32
  %v144 = vunpack.c.l.b16 %v33
  %v145 = vunpack.c.h.b16 %v33
  %v146 = vpack.c.b16 %v118, %v114
  %v147 = vpack.c.b16 %v119, %v115
  %v148 = vpack.c.b16 %v120, %v116
  %v149 = vpack.c.b16 %v121, %v117
  %v150 = vpack.c.b16 %v126, %v122
  %v151 = vpack.c.b16 %v127, %v123
  %v152 = vpack.c.b16 %v128, %v124
  %v153 = vpack.c.b16 %v129, %v125
  %v154 = vpack.c.b16 %v134, %v130
  %v155 = vpack.c.b16 %v135, %v131
  %v156 = vpack.c.b16 %v136, %v132
  %v157 = vpack.c.b16 %v137, %v133
  %v158 = vpack.c.b16 %v142, %v138
  %v159 = vpack.c.b16 %v143, %v139
  %v160 = vpack.c.b16 %v144, %v140
  %v161 = vpack.c.b16 %v145, %v141
  %v242 = vunpack.c.l.b16 %v34
  %v243 = vunpack.c.l.b16 %v35
  %v244 = vunpack.c.l.b16 %v36
  %v245 = vunpack.c.l.b16 %v37
  %v246 = vunpack.c.l.b16 %v38
  %v247 = vunpack.c.l.b16 %v39
  %v248 = vunpack.c.l.b16 %v40
  %v249 = vunpack.c.l.b16 %v41
  %v250 = vunpack.c.l.b16 %v42
  %v251 = vunpack.c.l.b16 %v43
  %v252 = vunpack.c.l.b16 %v44
  %v253 = vunpack.c.l.b16 %v45
  %v254 = vunpack.c.l.b16 %v46
  %v255 = vunpack.c.l.b16 %v47
  %v256 = vunpack.c.l.b16 %v48
  %v257 = vunpack.c.l.b16 %v49
  %v258 = vunpack.c.l.b16 %v50
  %v259 = vunpack.c.l.b16 %v51
  %v260 = vunpack.c.l.b16 %v52
  %v261 = vunpack.c.l.b16 %v53
  %v262 = vunpack.c.l.b16 %v54
  %v263 = vunpack.c.l.b16 %v55
  %v264 = vunpack.c.l.b16 %v56
  %v265 = vunpack.c.l.b16 %v57
  %v266 = vunpack.c.l.b16 %v58
  %v267 = vunpack.c.l.b16 %v59
  %v268 = vunpack.c.l.b16 %v60
  %v269 = vunpack.c.l.b16 %v61
  %v270 = vunpack.c.l.b16 %v62
  %v271 = vunpack.c.l.b16 %v63
  %v272 = vunpack.c.l.b16 %v64
  %v273 = vunpack.c.l.b16 %v65
  %v274 = vunpack.c.l.b16 %v66
  %v275 = vunpack.c.l.b16 %v67
  %v276 = vunpack.c.l.b16 %v68
  %v277 = vunpack.c.l.b16 %v69
  %v278 = vunpack.c.l.b16 %v70
  %v279 = vunpack.c.l.b16 %v71
  %v280 = vunpack.c.l.b16 %v72
  %v281 = vunpack.c.l.b16 %v73
  %v282 = vunpack.c.l.b16 %v74
  %v283 = vunpack.c.l.b16 %v75
  %v284 = vunpack.c.l.b16 %v76
  %v285 = vunpack.c.l.b16 %v77
  %v286 = vunpack.c.l.b16 %v78
  %v287 = vunpack.c.l.b16 %v79
  %v288 = vunpack.c.l.b16 %v80
  %v289 = vunpack.c.l.b16 %v81
  %v290 = vunpack.c.l.b16 %v82
  %v291 = vunpack.c.l.b16 %v83
  %v292 = vunpack.c.l.b16 %v84
  %v293 = vunpack.c.l.b16 %v85
  %v294 = vunpack.c.l.b16 %v86
  %v295 = vunpack.c.l.b16 %v87
  %v296 = vunpack.c.l.b16 %v88
  %v297 = vunpack.c.l.b16 %v89
  %v298 = vunpack.c.l.b16 %v90
  %v299 = vunpack.c.l.b16 %v91
  %v300 = vunpack.c.l.b16 %v92
  %v301 = vunpack.c.l.b16 %v93
  %v302 = vunpack.c.l.b16 %v94
  %v303 = vunpack.c.l.b16 %v95
  %v304 = vunpack.c.l.b16 %v96
  %v305 = vunpack.c.l.b16 %v97
  %v306 = vpack.c.b16 %v243, %v242
  %v307 = vpack.c.b16 %v245, %v244
  %v308 = vpack.c.b16 %v247, %v246
  %v309 = vpack.c.b16 %v249, %v248
  %v310 = vpack.c.b16 %v251, %v250
  %v311 = vpack.c.b16 %v253, %v252
  %v312 = vpack.c.b16 %v255, %v254
  %v313 = vpack.c.b16 %v257, %v256
  %v314 = vpack.c.b16 %v259, %v258
  %v315 = vpack.c.b16 %v261, %v260
  %v316 = vpack.c.b16 %v263, %v262
  %v317 = vpack.c.b16 %v265, %v264
  %v318 = vpack.c.b16 %v267, %v266
  %v319 = vpack.c.b16 %v269, %v268
  %v320 = vpack.c.b16 %v271, %v270
  %v321 = vpack.c.b16 %v273, %v272
  %v322 = vpack.c.b16 %v275, %v274
  %v323 = vpack.c.b16 %v277, %v276
  %v324 = vpack.c.b16 %v279, %v278
  %v325 = vpack.c.b16 %v281, %v280
  %v326 = vpack.c.b16 %v283, %v282
  %v327 = vpack.c.b16 %v285, %v284
  %v328 = vpack.c.b16 %v287, %v286
  %v329 = vpack.c.b16 %v289, %v288
  %v330 = vpack.c.b16 %v291, %v290
  %v331 = vpack.c.b16 %v293, %v292
  %v332 = vpack.c.b16 %v295, %v294
  %v333 = vpack.c.b16 %v297, %v296
  %v334 = vpack.c.b16 %v299, %v298
  %v335 = vpack.c.b16 %v301, %v300
  %v336 = vpack.c.b16 %v303, %v302
  %v337 = vpack.c.b16 %v305, %v304
  %370 = vmatprep.subr.bf16.mxu0 0
  %371 = vmatpush1.bf16.msra.mxu0 %v313
  %372 = vmatprep.subr.bf16.mxu0 0
  %373 = vmatpush1.bf16.msra.mxu0 %v312
  %374 = vmatprep.subr.bf16.mxu0 0
  %375 = vmatpush1.bf16.msra.mxu0 %v311
  %376 = vmatprep.subr.bf16.mxu0 0
  %377 = vmatpush1.bf16.msra.mxu0 %v310
  %378 = vmatprep.subr.bf16.mxu0 0
  %379 = vmatpush1.bf16.msra.mxu0 %v309
  %380 = vmatprep.subr.bf16.mxu0 0
  %381 = vmatpush1.bf16.msra.mxu0 %v308
  %382 = vmatprep.subr.bf16.mxu0 0
  %383 = vmatpush1.bf16.msra.mxu0 %v307
  %384 = vmatprep.subr.bf16.mxu0 0
  %385 = vmatpush1.bf16.msra.mxu0 %v306
  %386 = vmatprep.subr.bf16.mxu0 0
  %387 = vmatpush2.bf16.msra.mxu0 %v321
  %388 = vmatprep.subr.bf16.mxu0 0
  %389 = vmatpush2.bf16.msra.mxu0 %v320
  %390 = vmatprep.subr.bf16.mxu0 0
  %391 = vmatpush2.bf16.msra.mxu0 %v319
  %392 = vmatprep.subr.bf16.mxu0 0
  %393 = vmatpush2.bf16.msra.mxu0 %v318
  %394 = vmatprep.subr.bf16.mxu0 0
  %395 = vmatpush2.bf16.msra.mxu0 %v317
  %396 = vmatprep.subr.bf16.mxu0 0
  %397 = vmatpush2.bf16.msra.mxu0 %v316
  %398 = vmatprep.subr.bf16.mxu0 0
  %399 = vmatpush2.bf16.msra.mxu0 %v315
  %400 = vmatprep.subr.bf16.mxu0 0
  %401 = vmatpush2.bf16.msra.mxu0 %v314
  %402 = vmatprep.mubr.bf16.mxu0 %v147
  %403 = vmatmul.mubr.bf16.gmra.mxu0 %v146
  %v404 = vpop.f32.mrf.mxu0
  %v405 = vadd.f32 0.0, %v404
  %v406 = vpop.f32.mrf.mxu0
  %v407 = vpop.f32.mrf.mxu0
  %v408 = vadd.f32 0.0, %v407
  %v409 = vpop.f32.mrf.mxu0
  %410 = vmatprep.mubr.bf16.mxu0 %v151
  %411 = vmatmul.mubr.bf16.gmra.mxu0 %v150
  %v412 = vpop.f32.mrf.mxu0
  %v413 = vadd.f32 0.0, %v412
  %v414 = vpop.f32.mrf.mxu0
  %v415 = vpop.f32.mrf.mxu0
  %v416 = vadd.f32 0.0, %v415
  %v417 = vpop.f32.mrf.mxu0
  %418 = vmatprep.mubr.bf16.mxu0 %v155
  %419 = vmatmul.mubr.bf16.gmra.mxu0 %v154
  %v420 = vpop.f32.mrf.mxu0
  %v421 = vadd.f32 0.0, %v420
  %v422 = vpop.f32.mrf.mxu0
  %v423 = vpop.f32.mrf.mxu0
  %v424 = vadd.f32 0.0, %v423
  %v425 = vpop.f32.mrf.mxu0
  %426 = vmatprep.mubr.bf16.mxu0 %v159
  %427 = vmatmul.mubr.bf16.gmra.mxu0 %v158
  %v428 = vpop.f32.mrf.mxu0
  %v429 = vadd.f32 0.0, %v428
  %v430 = vpop.f32.mrf.mxu0
  %v431 = vpop.f32.mrf.mxu0
  %v432 = vadd.f32 0.0, %v431
  %v433 = vpop.f32.mrf.mxu0
  %434 = vdwg.mxu0
  %435 = vmatprep.subr.bf16.mxu0 0
  %436 = vmatpush1.bf16.msra.mxu0 %v329
  %437 = vmatprep.subr.bf16.mxu0 0
  %438 = vmatpush1.bf16.msra.mxu0 %v328
  %439 = vmatprep.subr.bf16.mxu0 0
  %440 = vmatpush1.bf16.msra.mxu0 %v327
  %441 = vmatprep.subr.bf16.mxu0 0
  %442 = vmatpush1.bf16.msra.mxu0 %v326
  %443 = vmatprep.subr.bf16.mxu0 0
  %444 = vmatpush1.bf16.msra.mxu0 %v325
  %445 = vmatprep.subr.bf16.mxu0 0
  %446 = vmatpush1.bf16.msra.mxu0 %v324
  %447 = vmatprep.subr.bf16.mxu0 0
  %448 = vmatpush1.bf16.msra.mxu0 %v323
  %449 = vmatprep.subr.bf16.mxu0 0
  %450 = vmatpush1.bf16.msra.mxu0 %v322
  %451 = vmatprep.subr.bf16.mxu0 0
  %452 = vmatpush2.bf16.msra.mxu0 %v337
  %453 = vmatprep.subr.bf16.mxu0 0
  %454 = vmatpush2.bf16.msra.mxu0 %v336
  %455 = vmatprep.subr.bf16.mxu0 0
  %456 = vmatpush2.bf16.msra.mxu0 %v335
  %457 = vmatprep.subr.bf16.mxu0 0
  %458 = vmatpush2.bf16.msra.mxu0 %v334
  %459 = vmatprep.subr.bf16.mxu0 0
  %460 = vmatpush2.bf16.msra.mxu0 %v333
  %461 = vmatprep.subr.bf16.mxu0 0
  %462 = vmatpush2.bf16.msra.mxu0 %v332
  %463 = vmatprep.subr.bf16.mxu0 0
  %464 = vmatpush2.bf16.msra.mxu0 %v331
  %465 = vmatprep.subr.bf16.mxu0 0
  %466 = vmatpush2.bf16.msra.mxu0 %v330
  %467 = vmatprep.mubr.bf16.mxu0 %v149
  %468 = vmatmul.mubr.bf16.gmra.mxu0 %v148
  %v469 = vpop.f32.mrf.mxu0
  %v470 = vadd.f32 %v405, %v469
  %v471 = vpop.f32.mrf.mxu0
  %v472 = vpop.f32.mrf.mxu0
  %v473 = vadd.f32 %v408, %v472
  %v474 = vpop.f32.mrf.mxu0
  %475 = vmatprep.mubr.bf16.mxu0 %v153
  %476 = vmatmul.mubr.bf16.gmra.mxu0 %v152
  %v477 = vpop.f32.mrf.mxu0
  %v478 = vadd.f32 %v413, %v477
  %v479 = vpop.f32.mrf.mxu0
  %v480 = vpop.f32.mrf.mxu0
  %v481 = vadd.f32 %v416, %v480
  %v482 = vpop.f32.mrf.mxu0
  %483 = vmatprep.mubr.bf16.mxu0 %v157
  %484 = vmatmul.mubr.bf16.gmra.mxu0 %v156
  %v485 = vpop.f32.mrf.mxu0
  %v486 = vadd.f32 %v421, %v485
  %v487 = vpop.f32.mrf.mxu0
  %v488 = vpop.f32.mrf.mxu0
  %v489 = vadd.f32 %v424, %v488
  %v490 = vpop.f32.mrf.mxu0
  %491 = vmatprep.mubr.bf16.mxu0 %v161
  %492 = vmatmul.mubr.bf16.gmra.mxu0 %v160
  %v493 = vpop.f32.mrf.mxu0
  %v494 = vadd.f32 %v429, %v493
  %v495 = vpop.f32.mrf.mxu0
  %v496 = vpop.f32.mrf.mxu0
  %v497 = vadd.f32 %v432, %v496
  %v498 = vpop.f32.mrf.mxu0
  %499 = vdwg.mxu0
  %vm500 = vcmask 261120
  %v501 = vsel %vm500, %v470, 0.0
  %502 = vadd.xlane.f32.xlu0 %v501
  %v503 = vpop.xlane.xlu0 %502
  %v504 = vsel %vm500, %v473, 0.0
  %505 = vadd.xlane.f32.xlu0 %v504
  %v506 = vpop.xlane.xlu0 %505
  %v507 = vsel %vm500, %v478, 0.0
  %508 = vadd.xlane.f32.xlu0 %v507
  %v509 = vpop.xlane.xlu0 %508
  %v510 = vsel %vm500, %v481, 0.0
  %511 = vadd.xlane.f32.xlu0 %v510
  %v512 = vpop.xlane.xlu0 %511
  %v513 = vsel %vm500, %v486, 0.0
  %514 = vadd.xlane.f32.xlu0 %v513
  %v515 = vpop.xlane.xlu0 %514
  %v516 = vsel %vm500, %v489, 0.0
  %517 = vadd.xlane.f32.xlu0 %v516
  %v518 = vpop.xlane.xlu0 %517
  %v519 = vsel %vm500, %v494, 0.0
  %520 = vadd.xlane.f32.xlu0 %v519
  %v521 = vpop.xlane.xlu0 %520
  %v522 = vsel %vm500, %v497, 0.0
  %523 = vadd.xlane.f32.xlu0 %v522
  %v524 = vpop.xlane.xlu0 %523
  %v525 = vmul.f32 %v470, %v470
  %v526 = vmul.f32 %v473, %v473
  %v527 = vmul.f32 %v478, %v478
  %v528 = vmul.f32 %v481, %v481
  %v529 = vmul.f32 %v486, %v486
  %v530 = vmul.f32 %v489, %v489
  %v531 = vmul.f32 %v494, %v494
  %v532 = vmul.f32 %v497, %v497
  %v533 = vsel %vm500, %v525, 0.0
  %534 = vadd.xlane.f32.xlu0 %v533
  %v535 = vpop.xlane.xlu0 %534
  %v536 = vsel %vm500, %v526, 0.0
  %537 = vadd.xlane.f32.xlu0 %v536
  %v538 = vpop.xlane.xlu0 %537
  %v539 = vsel %vm500, %v527, 0.0
  %540 = vadd.xlane.f32.xlu0 %v539
  %v541 = vpop.xlane.xlu0 %540
  %v542 = vsel %vm500, %v528, 0.0
  %543 = vadd.xlane.f32.xlu0 %v542
  %v544 = vpop.xlane.xlu0 %543
  %v545 = vsel %vm500, %v529, 0.0
  %546 = vadd.xlane.f32.xlu0 %v545
  %v547 = vpop.xlane.xlu0 %546
  %v548 = vsel %vm500, %v530, 0.0
  %549 = vadd.xlane.f32.xlu0 %v548
  %v550 = vpop.xlane.xlu0 %549
  %v551 = vsel %vm500, %v531, 0.0
  %552 = vadd.xlane.f32.xlu0 %v551
  %v553 = vpop.xlane.xlu0 %552
  %v554 = vsel %vm500, %v532, 0.0
  %555 = vadd.xlane.f32.xlu0 %v554
  %v556 = vpop.xlane.xlu0 %555
  %v557 = vmul.f32 %v503, 0.03125
  %v558 = vmul.f32 %v506, 0.03125
  %v559 = vmul.f32 %v509, 0.03125
  %v560 = vmul.f32 %v512, 0.03125
  %v561 = vmul.f32 %v515, 0.03125
  %v562 = vmul.f32 %v518, 0.03125
  %v563 = vmul.f32 %v521, 0.03125
  %v564 = vmul.f32 %v524, 0.03125
  %v565 = vmul.f32 %v535, 0.03125
  %v566 = vmul.f32 %v538, 0.03125
  %v567 = vmul.f32 %v541, 0.03125
  %v568 = vmul.f32 %v544, 0.03125
  %v569 = vmul.f32 %v547, 0.03125
  %v570 = vmul.f32 %v550, 0.03125
  %v571 = vmul.f32 %v553, 0.03125
  %v572 = vmul.f32 %v556, 0.03125
  %v573 = vmul.f32 %v557, %v557
  %v574 = vmul.f32 %v558, %v558
  %v575 = vmul.f32 %v559, %v559
  %v576 = vmul.f32 %v560, %v560
  %v577 = vmul.f32 %v561, %v561
  %v578 = vmul.f32 %v562, %v562
  %v579 = vmul.f32 %v563, %v563
  %v580 = vmul.f32 %v564, %v564
  %v581 = vsub.f32 %v565, %v573
  %v582 = vsub.f32 %v566, %v574
  %v583 = vsub.f32 %v567, %v575
  %v584 = vsub.f32 %v568, %v576
  %v585 = vsub.f32 %v569, %v577
  %v586 = vsub.f32 %v570, %v578
  %v587 = vsub.f32 %v571, %v579
  %v588 = vsub.f32 %v572, %v580
  %v589 = vmax.f32 %v581, 0.0
  %v590 = vmax.f32 %v582, 0.0
  %v591 = vmax.f32 %v583, 0.0
  %v592 = vmax.f32 %v584, 0.0
  %v593 = vmax.f32 %v585, 0.0
  %v594 = vmax.f32 %v586, 0.0
  %v595 = vmax.f32 %v587, 0.0
  %v596 = vmax.f32 %v588, 0.0
  %v597 = vld [vmem:[%s2] sm:$0xff]
  %v598 = vld [vmem:[%s2 + $0x8] sm:$0xff]
  %v599 = vld [vmem:[%s2 + $0x10] sm:$0xff]
  %v600 = vld [vmem:[%s2 + $0x18] sm:$0xff]
  %v601 = vld [vmem:[%s2 + $0x20] sm:$0xff]
  %v602 = vld [vmem:[%s2 + $0x28] sm:$0xff]
  %v603 = vld [vmem:[%s2 + $0x30] sm:$0xff]
  %v604 = vld [vmem:[%s2 + $0x38] sm:$0xff]
  %v605 = vadd.f32 %v589, 1e-05
  %v606 = vadd.f32 %v590, 1e-05
  %v607 = vadd.f32 %v591, 1e-05
  %v608 = vadd.f32 %v592, 1e-05
  %v609 = vadd.f32 %v593, 1e-05
  %v610 = vadd.f32 %v594, 1e-05
  %v611 = vadd.f32 %v595, 1e-05
  %v612 = vadd.f32 %v596, 1e-05
  %v613 = vrsqrt.pop %v605
  %v614 = vrsqrt.pop %v606
  %v615 = vrsqrt.pop %v607
  %v616 = vrsqrt.pop %v608
  %v617 = vrsqrt.pop %v609
  %v618 = vrsqrt.pop %v610
  %v619 = vrsqrt.pop %v611
  %v620 = vrsqrt.pop %v612
  %v621 = vmul.f32 %v597, %v613
  %v622 = vmul.f32 %v598, %v614
  %v623 = vmul.f32 %v599, %v615
  %v624 = vmul.f32 %v600, %v616
  %v625 = vmul.f32 %v601, %v617
  %v626 = vmul.f32 %v602, %v618
  %v627 = vmul.f32 %v603, %v619
  %v628 = vmul.f32 %v604, %v620
  %v629 = vld [vmem:[%s3] sm:$0xff]
  %v630 = vld [vmem:[%s3 + $0x8] sm:$0xff]
  %v631 = vld [vmem:[%s3 + $0x10] sm:$0xff]
  %v632 = vld [vmem:[%s3 + $0x18] sm:$0xff]
  %v633 = vld [vmem:[%s3 + $0x20] sm:$0xff]
  %v634 = vld [vmem:[%s3 + $0x28] sm:$0xff]
  %v635 = vld [vmem:[%s3 + $0x30] sm:$0xff]
  %v636 = vld [vmem:[%s3 + $0x38] sm:$0xff]
  %v637 = vmul.f32 %v557, %v621
  %v638 = vmul.f32 %v558, %v622
  %v639 = vmul.f32 %v559, %v623
  %v640 = vmul.f32 %v560, %v624
  %v641 = vmul.f32 %v561, %v625
  %v642 = vmul.f32 %v562, %v626
  %v643 = vmul.f32 %v563, %v627
  %v644 = vmul.f32 %v564, %v628
  %v645 = vsub.f32 %v629, %v637
  %v646 = vsub.f32 %v630, %v638
  %v647 = vsub.f32 %v631, %v639
  %v648 = vsub.f32 %v632, %v640
  %v649 = vsub.f32 %v633, %v641
  %v650 = vsub.f32 %v634, %v642
  %v651 = vsub.f32 %v635, %v643
  %v652 = vsub.f32 %v636, %v644
  %654 = vset.pattern.permute.xlu0 0
  %655 = vperm.xlu0 %654, %v621
  %v656 = vpop.permute.xlu0 %655
  %659 = vset.pattern.permute.xlu0 0
  %660 = vperm.xlu0 %659, %v622
  %v661 = vpop.permute.xlu0 %660
  %664 = vset.pattern.permute.xlu0 0
  %665 = vperm.xlu0 %664, %v623
  %v666 = vpop.permute.xlu0 %665
  %669 = vset.pattern.permute.xlu0 0
  %670 = vperm.xlu0 %669, %v624
  %v671 = vpop.permute.xlu0 %670
  %674 = vset.pattern.permute.xlu0 0
  %675 = vperm.xlu0 %674, %v625
  %v676 = vpop.permute.xlu0 %675
  %679 = vset.pattern.permute.xlu0 0
  %680 = vperm.xlu0 %679, %v626
  %v681 = vpop.permute.xlu0 %680
  %684 = vset.pattern.permute.xlu0 0
  %685 = vperm.xlu0 %684, %v627
  %v686 = vpop.permute.xlu0 %685
  %689 = vset.pattern.permute.xlu0 0
  %690 = vperm.xlu0 %689, %v628
  %v691 = vpop.permute.xlu0 %690
  %v693 = vmul.f32 %v470, %v656
  %v694 = vmul.f32 %v473, %v661
  %v695 = vmul.f32 %v478, %v666
  %v696 = vmul.f32 %v481, %v671
  %v697 = vmul.f32 %v486, %v676
  %v698 = vmul.f32 %v489, %v681
  %v699 = vmul.f32 %v494, %v686
  %v700 = vmul.f32 %v497, %v691
  %702 = vset.pattern.permute.xlu0 0
  %703 = vperm.xlu0 %702, %v645
  %v704 = vpop.permute.xlu0 %703
  %707 = vset.pattern.permute.xlu0 0
  %708 = vperm.xlu0 %707, %v646
  %v709 = vpop.permute.xlu0 %708
  %712 = vset.pattern.permute.xlu0 0
  %713 = vperm.xlu0 %712, %v647
  %v714 = vpop.permute.xlu0 %713
  %717 = vset.pattern.permute.xlu0 0
  %718 = vperm.xlu0 %717, %v648
  %v719 = vpop.permute.xlu0 %718
  %722 = vset.pattern.permute.xlu0 0
  %723 = vperm.xlu0 %722, %v649
  %v724 = vpop.permute.xlu0 %723
  %727 = vset.pattern.permute.xlu0 0
  %728 = vperm.xlu0 %727, %v650
  %v729 = vpop.permute.xlu0 %728
  %732 = vset.pattern.permute.xlu0 0
  %733 = vperm.xlu0 %732, %v651
  %v734 = vpop.permute.xlu0 %733
  %737 = vset.pattern.permute.xlu0 0
  %738 = vperm.xlu0 %737, %v652
  %v739 = vpop.permute.xlu0 %738
  %v741 = vadd.f32 %v693, %v704
  %v742 = vadd.f32 %v694, %v709
  %v743 = vadd.f32 %v695, %v714
  %v744 = vadd.f32 %v696, %v719
  %v745 = vadd.f32 %v697, %v724
  %v746 = vadd.f32 %v698, %v729
  %v747 = vadd.f32 %v699, %v734
  %v748 = vadd.f32 %v700, %v739
  %v749 = vmax.f32 %v741, 0.0
  %v750 = vmax.f32 %v742, 0.0
  %v751 = vmax.f32 %v743, 0.0
  %v752 = vmax.f32 %v744, 0.0
  %v753 = vmax.f32 %v745, 0.0
  %v754 = vmax.f32 %v746, 0.0
  %v755 = vmax.f32 %v747, 0.0
  %v756 = vmax.f32 %v748, 0.0
  %757 = vst.msk [vmem:[%s4] sm:$0xff] %vm500, %v749
  %758 = vst.msk [vmem:[%s4 + $0x8] sm:$0xff] %vm500, %v750
  %759 = vst.msk [vmem:[%s4 + $0x10] sm:$0xff] %vm500, %v751
  %760 = vst.msk [vmem:[%s4 + $0x18] sm:$0xff] %vm500, %v752
  %761 = vst.msk [vmem:[%s4 + $0x20] sm:$0xff] %vm500, %v753
  %762 = vst.msk [vmem:[%s4 + $0x28] sm:$0xff] %vm500, %v754
  %763 = vst.msk [vmem:[%s4 + $0x30] sm:$0xff] %vm500, %v755
  %764 = vst.msk [vmem:[%s4 + $0x38] sm:$0xff] %vm500, %v756
  // Predicated region
  $region18: #{tpu_custom_call.1} parent=0 // pred_check
    _
  $region19: #{tpu_custom_call.1} parent=0 // pred_check_branch
    %766 = sbr.rel (0) target = $region21
  $region20: #{tpu_custom_call.1} parent=0 // pred_region
    _
  $region21: #{tpu_custom_call.1} parent=0 // pred_fallthru
    _
  // Predicated region
  $region22: #{tpu_custom_call.1} parent=0 // pred_check
    _
  $region23: #{tpu_custom_call.1} parent=0 // pred_check_branch
    %768 = sbr.rel (0) target = $region25
  $region24: #{tpu_custom_call.1} parent=0 // pred_region
    _
  $region25: #{tpu_custom_call.1} parent=0 // pred_fallthru
    _

</llo_original>
